<compile_context>
chip_gen: v6e
topology: v6e:2x2x1
jax: 0.10.0
libtpu: 0.0.40
codegen_flags: <defaults>
</compile_context>

<pallas_src>
import functools

import jax
import jax.numpy as jnp
import numpy as np
from jax.experimental import pallas as pl
from jax.experimental.pallas import tpu as pltpu

_LANE = 128
_SUBLANE = 8
_MIB = 1024 * 1024


# ---------------------------------------------------------------------------
# Generation-aware VMEM budgeting
# ---------------------------------------------------------------------------
@functools.lru_cache(maxsize=None)
def _vmem_limit_bytes():
    """Scoped-VMEM request: 64 MiB on 128 MiB chips (v5e/v6e), 40 MiB on v7x."""
    try:
        cap = int(pltpu.get_tpu_info().vmem_capacity_bytes)
    except Exception:
        cap = 64 * _MIB                       # conservative (v7x-sized) fallback
    return 64 * _MIB if cap >= 128 * _MIB else 40 * _MIB


def _num_tensorcores_hint():
    # v7x (64 MiB VMEM per TensorCore) has 2 TCs per chip; v5e / v6e have 1.
    return 2 if _vmem_limit_bytes() < 64 * _MIB else 1


def _stream_budget_bytes():
    # Headroom for pipeline bookkeeping / internal scratch under the request.
    return _vmem_limit_bytes() - 6 * _MIB


def _choose_tiles(m, k, itemsize, resident_f32_blocks, row_blocks=None):
    """Pick (row block TM, K tile TK) for the K-tiled Gram reduction.

    `resident_f32_blocks` counts how many (TM, M) f32 blocks stay in VMEM for
    the whole reduction (output / target double buffers + scratch); the
    double-buffered (M, TK) X stream is sized against what remains.
    """
    sub = max(_SUBLANE, (4 * _SUBLANE) // itemsize)   # 8 f32 / 16 bf16 / 32 int8
    budget = _stream_budget_bytes()

    def ok(n):
        return n >= 1 and m % n == 0 and (m // n) % sub == 0

    if row_blocks is not None and ok(row_blocks):
        num_m = row_blocks
    else:
        # Give each v7x TensorCore its own row block whenever alignment allows.
        num_m = 2 if (_num_tensorcores_hint() > 1 and m >= 2 * sub and ok(2)) else 1
        # For very large M, shrink the resident (TM, M) f32 blocks until the
        # K streams still have room.
        while (resident_f32_blocks * (m // num_m) * m * 4 > budget - 4 * _MIB
               and ok(num_m * 2)):
            num_m *= 2
    tm = m // num_m

    stream = max(budget - resident_f32_blocks * tm * m * 4, 2 * _MIB)
    # X is deduplicated: the only HBM input stream is the double-buffered
    # (M, TK) block; the lhs row block is sliced from it inside the kernel.
    tk = (stream // (2 * m * itemsize)) // _LANE * _LANE
    tk = max(_LANE, min(tk, k))
    return tm, tk


# ---------------------------------------------------------------------------
# Kernels
# ---------------------------------------------------------------------------
def _gram_step(x_ref, acc_ref, *, tm, tk, k_total, mask_k):
    """acc += X[rows(i)] @ X.T for one K tile (acc zero-initialised at kk==0)."""
    i = pl.program_id(0)
    kk = pl.program_id(1)
    nk = pl.num_programs(1)

    @pl.when(kk == 0)
    def _():
        acc_ref[...] = jnp.zeros_like(acc_ref)

    row0 = pl.multiple_of(i * tm, tm)

    def lhs_view():
        if tm == x_ref.shape[0]:               # single row block: lhs == rhs
            return x_ref[...]
        return x_ref[pl.ds(row0, tm), :]       # slice rows out of the rhs block

    def accumulate(lhs, rhs):
        # Contract both operands over their last (lane) axis -> X @ X.T with
        # no materialised transpose; f32 accumulation on the MXU.
        acc_ref[...] += jax.lax.dot_general(
            lhs, rhs,
            dimension_numbers=(((1,), (1,)), ((), ())),
            preferred_element_type=jnp.float32)

    if mask_k:
        # Steady-state steps are pure MXU; the masking VALU work (iota,
        # compare, select) only runs on the final, ragged K tile.
        @pl.when(kk < nk - 1)
        def _():
            accumulate(lhs_view(), x_ref[...])

        @pl.when(kk == nk - 1)
        def _():
            valid = (jax.lax.broadcasted_iota(jnp.int32, (1, tk), 1)
                     + kk * tk) < k_total
            lhs = lhs_view()
            rhs = x_ref[...]
            accumulate(jnp.where(valid, lhs, jnp.zeros_like(lhs)),
                       jnp.where(valid, rhs, jnp.zeros_like(rhs)))
    else:
        accumulate(lhs_view(), x_ref[...])


def _gram_kernel(x_ref, g_ref, *, scale, tm, tk, k_total, mask_k):
    # Accumulate directly into the output block: its block index is constant
    # along the K axis, so it stays VMEM-resident across the reduction.
    _gram_step(x_ref, g_ref, tm=tm, tk=tk, k_total=k_total, mask_k=mask_k)

    @pl.when(pl.program_id(1) == pl.num_programs(1) - 1)
    def _():
        g_ref[...] = g_ref[...] * scale


def _style_loss_kernel(x_ref, tgt_ref, loss_ref, acc_ref, *,
                       scale, inv_gram_size, tm, tk, k_total, mask_k):
    _gram_step(x_ref, acc_ref, tm=tm, tk=tk, k_total=k_total, mask_k=mask_k)

    @pl.when(pl.program_id(1) == pl.num_programs(1) - 1)
    def _():
        # Scale + squared-diff reduction happen once, in the finalize branch.
        diff = acc_ref[...] * scale - tgt_ref[...].astype(jnp.float32)
        loss_ref[...] = (jnp.sum(diff * diff) * inv_gram_size).reshape(1, 1, 1)


# ---------------------------------------------------------------------------
# Wrappers
# ---------------------------------------------------------------------------
def _compiler_params():
    # "parallel" leading axis lets multi-TC chips (v7x) shard the row blocks.
    return pltpu.CompilerParams(
        dimension_semantics=("parallel", "arbitrary"),
        vmem_limit_bytes=_vmem_limit_bytes())


def _features(x, compute_dtype):
    a, b, c, d = x.shape
    m, k = a * b, c * d
    feats = x.reshape(m, k)                    # row-major: matches torch .view
    if compute_dtype is not None and feats.dtype != jnp.dtype(compute_dtype):
        feats = feats.astype(compute_dtype)    # bf16 by default: native MXU rate
    return feats, m, k


def gram_matrix(x, *, block_k=None, row_blocks=None, compute_dtype=jnp.bfloat16):
    """Pallas equivalent of StyleLoss.gram_matrix (NCHW input) -> f32 (M, M).

    compute_dtype=jnp.bfloat16 (default) trades a tiny numerics change for
    native MXU rate; pass compute_dtype=None to keep the input dtype.
    """
    feats, m, k = _features(x, compute_dtype)
    itemsize = feats.dtype.itemsize
    tm, tk = _choose_tiles(m, k, itemsize, resident_f32_blocks=2,
                           row_blocks=row_blocks)
    if block_k is not None:
        tk = min(block_k, k)
    num_m, num_k = m // tm, pl.cdiv(k, tk)
    scale = 1.0 / float(m * k)
    kernel = functools.partial(
        _gram_kernel, scale=scale, tm=tm, tk=tk, k_total=k,
        mask_k=(k % tk != 0))
    return pl.pallas_call(
        kernel,
        out_shape=jax.ShapeDtypeStruct((m, m), jnp.float32),
        grid=(num_m, num_k),
        in_specs=[pl.BlockSpec((m, tk), lambda i, kk: (0, kk))],   # all rows of X
        out_specs=pl.BlockSpec((tm, m), lambda i, kk: (i, 0)),     # resident acc
        compiler_params=_compiler_params(),
        cost_estimate=pl.CostEstimate(
            flops=2 * m * m * k,
            transcendentals=0,
            bytes_accessed=num_m * m * k * itemsize + m * m * 4),
    )(feats)


def style_loss_forward(x, target_gram, *, block_k=None, row_blocks=None,
                       compute_dtype=jnp.bfloat16):
    """Returns (input_unchanged, mse(gram(x), target_gram)).

    The Gram of `x` is never written back to HBM — only per-row-block partial
    losses (summed here), since the PyTorch forward discards G.
    """
    feats, m, k = _features(x, compute_dtype)
    itemsize = feats.dtype.itemsize
    tm, tk = _choose_tiles(m, k, itemsize, resident_f32_blocks=3,
                           row_blocks=row_blocks)
    if block_k is not None:
        tk = min(block_k, k)
    num_m, num_k = m // tm, pl.cdiv(k, tk)
    scale = 1.0 / float(m * k)
    kernel = functools.partial(
        _style_loss_kernel, scale=scale, inv_gram_size=1.0 / float(m * m),
        tm=tm, tk=tk, k_total=k, mask_k=(k % tk != 0))
    partial_losses = pl.pallas_call(
        kernel,
        out_shape=jax.ShapeDtypeStruct((num_m, 1, 1), jnp.float32),
        grid=(num_m, num_k),
        in_specs=[
            pl.BlockSpec((m, tk), lambda i, kk: (0, kk)),   # all rows of X
            pl.BlockSpec((tm, m), lambda i, kk: (i, 0)),    # target Gram rows
        ],
        out_specs=pl.BlockSpec((1, 1, 1), lambda i, kk: (i, 0, 0)),
        scratch_shapes=[pltpu.VMEM((tm, m), jnp.float32)],
        compiler_params=_compiler_params(),
        cost_estimate=pl.CostEstimate(
            flops=2 * m * m * k,
            transcendentals=0,
            bytes_accessed=num_m * m * k * itemsize + m * m * 4),
    )(feats, target_gram)
    # Each partial = (sum of squared diffs over its row block) / (M*M);
    # summing the row blocks gives the full 'mean' reduction.
    return x, jnp.sum(partial_losses)


class StyleLoss:
    """JAX/Pallas port of the PyTorch StyleLoss module (forward only)."""

    def __init__(self, target_feature, compute_dtype=jnp.bfloat16):
        self.compute_dtype = compute_dtype
        # Equivalent of: self.target = gram_matrix(target_feature).detach()
        self.target = jax.lax.stop_gradient(
            gram_matrix(target_feature, compute_dtype=compute_dtype))
        self.loss = jnp.float32(0.0)

    def __call__(self, x):
        # NOTE: mutating self.loss is a Python side effect (not jit-safe);
        # use style_loss_forward directly under jit/grad.
        x_out, loss = style_loss_forward(x, self.target,
                                         compute_dtype=self.compute_dtype)
        self.loss = loss
        return x_out  # forward returns the input unchanged


# ---------------------------------------------------------------------------
# Demo / self-check
# ---------------------------------------------------------------------------
if __name__ == "__main__":
    key = jax.random.PRNGKey(0)
    k_tgt, k_in, k2_tgt, k2_in, k3_tgt, k3_in = jax.random.split(key, 6)

    def ref_gram(t, compute_dtype):
        a, b, c, d = t.shape
        f = t.reshape(a * b, c * d)
        if compute_dtype is not None:
            f = f.astype(compute_dtype)
        f64 = np.asarray(f.astype(jnp.float32), dtype=np.float64)
        return (f64 @ f64.T) / float(a * b * c * d)

    def ref_loss(xx, tt, compute_dtype):
        d = ref_gram(xx, compute_dtype) - ref_gram(tt, compute_dtype)
        return np.mean(d * d)

    def check_close(got, want, name, rtol=2e-4):
        got = np.asarray(got, dtype=np.float64)
        want = np.asarray(want, dtype=np.float64)
        tol = rtol * max(float(np.max(np.abs(want))), 1e-30) + 1e-8
        err = float(np.max(np.abs(got - want)))
        assert err <= tol, (name, err, tol)

    # --- 1) Module usage, NCHW (2,4,16,16), default bf16 compute -----------
    shape = (2, 4, 16, 16)
    target_feature = jax.random.normal(k_tgt, shape, dtype=jnp.float32)
    x = jax.random.normal(k_in, shape, dtype=jnp.float32)

    module = StyleLoss(target_feature)
    out = jax.block_until_ready(module(x))
    loss = jax.block_until_ready(module.loss)
    assert out.shape == x.shape and bool(jnp.all(out == x)), "forward must return input"
    check_close(module.target, ref_gram(target_feature, jnp.bfloat16), "target gram")
    check_close(loss, ref_loss(x, target_feature, jnp.bfloat16), "loss (2,4,16,16)")

    # --- 2) f32 compute path, small K tile -> multi-step masked reduction --
    shape2 = (1, 8, 16, 20)                 # K = 320, TK = 128 -> 3 steps, masked tail
    tgt2 = jax.random.normal(k2_tgt, shape2, dtype=jnp.float32)
    x2 = jax.random.normal(k2_in, shape2, dtype=jnp.float32)
    g2 = jax.block_until_ready(gram_matrix(x2, block_k=128, compute_dtype=None))
    check_close(g2, ref_gram(x2, None), "gram f32 tiled/masked", rtol=1e-2)
    tgt2_gram = gram_matrix(tgt2, block_k=128, compute_dtype=None)
    _, loss2 = style_loss_forward(x2, tgt2_gram, block_k=128, compute_dtype=None)
    loss2 = jax.block_until_ready(loss2)
    check_close(loss2, ref_loss(x2, tgt2, None), "loss f32 tiled/masked", rtol=1e-2)

    # --- 3) Larger channel count, forced 2 row blocks ("parallel" axis) ----
    shape3 = (2, 256, 16, 16)               # M = 512 -> TM = 256, 2 row blocks
    tgt3 = jax.random.normal(k3_tgt, shape3, dtype=jnp.float32)
    x3 = jax.random.normal(k3_in, shape3, dtype=jnp.float32)
    g3 = jax.block_until_ready(gram_matrix(x3, row_blocks=2))
    check_close(g3, ref_gram(x3, jnp.bfloat16), "gram row-split")
    _, loss3 = style_loss_forward(x3, gram_matrix(tgt3, row_blocks=2), row_blocks=2)
    loss3 = jax.block_until_ready(loss3)
    check_close(loss3, ref_loss(x3, tgt3, jnp.bfloat16), "loss row-split")

    print("KERNEL_OK")
</pallas_src>

<mosaic_0001>
module attributes {stable_mosaic.version = 11 : i64} {
  func.func @_gram_kernel(%arg0: i32, %arg1: i32, %arg2: memref<8x256xbf16, #tpu.memory_space<vmem>>, %arg3: memref<8x8xf32, #tpu.memory_space<vmem>>) attributes {dimension_semantics = [#tpu.dimension_semantics<parallel>, #tpu.dimension_semantics<arbitrary>], iteration_bounds = array<i64: 1, 1>, scalar_prefetch = 0 : i64, scratch_operands = 0 : i64, tpu.core_type = #tpu.core_type<tc>, window_params = [{transform_indices = @transform_0, window_bounds = array<i64: 8, 256>}, {transform_indices = @transform_1, window_bounds = array<i64: 8, 8>}]} {
    %c0_i32 = arith.constant 0 : i32
    %0 = arith.cmpi eq, %arg1, %c0_i32 : i32
    %1 = arith.extui %0 : i1 to i32
    %c0_i32_0 = arith.constant 0 : i32
    %2 = arith.cmpi ne, %1, %c0_i32_0 : i32
    scf.if %2 {
      %cst_10 = arith.constant 0.000000e+00 : f32
      %12 = vector.broadcast %cst_10 : f32 to vector<8x8xf32>
      %c0_11 = arith.constant 0 : index
      %c0_12 = arith.constant 0 : index
      %13 = vector.load %arg3[%c0_11, %c0_12] : memref<8x8xf32, #tpu.memory_space<vmem>>, vector<8x8xf32>
      tpu.vector_store %arg3[%c0_11, %c0_12], %12 {strides = array<i32>} : memref<8x8xf32, #tpu.memory_space<vmem>>, vector<8x8xf32>,
    } else {
    }
    %c0 = arith.constant 0 : index
    %c0_1 = arith.constant 0 : index
    %3 = vector.load %arg2[%c0, %c0_1] : memref<8x256xbf16, #tpu.memory_space<vmem>>, vector<8x256xbf16>
    %c0_2 = arith.constant 0 : index
    %c0_3 = arith.constant 0 : index
    %4 = vector.load %arg2[%c0_2, %c0_3] : memref<8x256xbf16, #tpu.memory_space<vmem>>, vector<8x256xbf16>
    %c0_4 = arith.constant 0 : index
    %c0_5 = arith.constant 0 : index
    %5 = vector.load %arg3[%c0_4, %c0_5] : memref<8x8xf32, #tpu.memory_space<vmem>>, vector<8x8xf32>
    %cst = arith.constant dense<0.000000e+00> : vector<8x8xf32>
    %6 = tpu.matmul %3, %4, %cst {dimension_numbers = #tpu.dot_dimension_numbers<[1], [1], [0], [0], [0, 0, 1, 0], [], []>} : vector<8x256xbf16>, vector<8x256xbf16>, vector<8x8xf32> -> vector<8x8xf32>
    %7 = arith.addf %5, %6 : vector<8x8xf32>
    %c0_6 = arith.constant 0 : index
    %c0_7 = arith.constant 0 : index
    %8 = vector.load %arg3[%c0_6, %c0_7] : memref<8x8xf32, #tpu.memory_space<vmem>>, vector<8x8xf32>
    tpu.vector_store %arg3[%c0_6, %c0_7], %7 {strides = array<i32>} : memref<8x8xf32, #tpu.memory_space<vmem>>, vector<8x8xf32>,
    %c0_i32_8 = arith.constant 0 : i32
    %9 = arith.cmpi eq, %arg1, %c0_i32_8 : i32
    %10 = arith.extui %9 : i1 to i32
    %c0_i32_9 = arith.constant 0 : i32
    %11 = arith.cmpi ne, %10, %c0_i32_9 : i32
    scf.if %11 {
      %c0_10 = arith.constant 0 : index
      %c0_11 = arith.constant 0 : index
      %12 = vector.load %arg3[%c0_10, %c0_11] : memref<8x8xf32, #tpu.memory_space<vmem>>, vector<8x8xf32>
      %cst_12 = arith.constant 4.8828125E-4 : f32
      %13 = vector.broadcast %cst_12 : f32 to vector<8x8xf32>
      %14 = arith.mulf %12, %13 : vector<8x8xf32>
      %c0_13 = arith.constant 0 : index
      %c0_14 = arith.constant 0 : index
      %15 = vector.load %arg3[%c0_13, %c0_14] : memref<8x8xf32, #tpu.memory_space<vmem>>, vector<8x8xf32>
      tpu.vector_store %arg3[%c0_13, %c0_14], %14 {strides = array<i32>} : memref<8x8xf32, #tpu.memory_space<vmem>>, vector<8x8xf32>,
    } else {
    }
    return
  }
  func.func @transform_0(%arg0: i32, %arg1: i32) -> (i32, i32) {
    %c0_i32 = arith.constant 0 : i32
    %c0_i32_0 = arith.constant 0 : i32
    return %c0_i32, %arg1 : i32, i32
  }
  func.func @transform_1(%arg0: i32, %arg1: i32) -> (i32, i32) {
    %c0_i32 = arith.constant 0 : i32
    %c0_i32_0 = arith.constant 0 : i32
    return %arg0, %c0_i32 : i32, i32
  }
}

</mosaic_0001>

<llo_original>
// kernel: tpu_custom_call.1
$region0: #{tpu_custom_call.1}
  #allocation0 [shape = 'u32[]', space=smem, size = 0x4, offset = 0x4, fixed_abs, tag = 'smem constant byte address 0x4 - core index']
  #allocation1 [shape = 'u32[144,128]{1,0:T(1,128)}', space=vmem, size = 0x12000, scoped, tag = 'internal scratch']
  %s0 = inlined_call_operand.hbm [shape: bf16[8,256], index: 0, kind: input, shape index: {}]
  %s1 = inlined_call_operand.hbm [shape: f32[8,8], index: 1, kind: output, shape index: {}]
  %s2 = sld [smem:[#allocation0]]
  $region26: #{tpu_custom_call.1} parent=0
    _
  %s4 = ssub.s32 1, %s2
  %s5 = scalar_select 0, %s4, %s2
  $region1: #{tpu_custom_call.1} parent=0
    #allocation2 [shape = 'u8[4096]{0}', space=vmem, size = 0x1000, scoped, tag = 'input window, operand 0, single buffered']
    #allocation3 [shape = 's32[1]{0}', space=sflag, size = 0x4, scoped, tag = 'scoped memory for tpu_custom_call.1']
    #allocation4 [shape = 's32[1]{0}', space=sflag, size = 0x4, scoped, tag = 'scoped memory for tpu_custom_call.1']
    #allocation5 [shape = 'u8[4096]{0}', space=vmem, size = 0x1000, scoped, tag = 'output window, operand 0, single buffered']
    %6 = vsyncpa [#allocation3], 0
    %7 = vsyncpa [#allocation4], 0
    // Predicated region
    $region2: #{tpu_custom_call.1} parent=1 // pred_check
      _
    $region3: #{tpu_custom_call.1} parent=1 // pred_check_branch
      %9 = sbr.rel (0) target = $region5
    $region4: #{tpu_custom_call.1} parent=1 // pred_region
      %s11 = ssub.s32 128, 128
      %12 = vsyncadd [#allocation3], %s11
      %s14 = sshll.u32 [#allocation2], 4
      %s15 = int_to_ptr.vmem [resolvable:$true] %s14
      %17 = dma.hbm_to_vmem [thread:$0]  %s0, 128, %s15, [#allocation3]
    $region5: #{tpu_custom_call.1} parent=1 // pred_fallthru
      _
    // Predicated region
    $region6: #{tpu_custom_call.1} parent=1 // pred_check
      _
    $region7: #{tpu_custom_call.1} parent=1 // pred_check_branch
      %19 = sbr.rel (0) target = $region9
    $region8: #{tpu_custom_call.1} parent=1 // pred_region
      %20 = dma.done [#allocation3], 128
    $region9: #{tpu_custom_call.1} parent=1 // pred_fallthru
      _
    %p22 = scmp.eq.s32.totalorder 0, 0
    // Predicated region
    $region10: #{tpu_custom_call.1} parent=1 // pred_check
      %p23 = pneg %p22
    $region11: #{tpu_custom_call.1} parent=1 // pred_check_branch
      %25 = sbr.rel (%p23) target = $region13
    $region12: #{tpu_custom_call.1} parent=1 // pred_region
      %vm26 = vcmask 64512
      %27 = vst.msk [vmem:[#allocation5] sm:$0xff] %vm26, 0.0
    $region13: #{tpu_custom_call.1} parent=1 // pred_fallthru
      _
    %v28 = vld [vmem:[#allocation2] sm:$0xff]
    %v29 = vld [vmem:[#allocation5] sm:$0xff]
    %v31 = vunpack.c.l.b16 %v28
    %v32 = vunpack.c.h.b16 %v28
    %v33 = vpack.c.b16 %v31, %v31
    %v34 = vpack.c.b16 %v32, %v32
    %37 = vmatprep.subr.bf16.mxu0 0
    %38 = vmatpush1.bf16.xpose.msra.mxu0 0
    %39 = vmatprep.subr.bf16.mxu0 0
    %40 = vmatpush1.bf16.xpose.msra.mxu0 0
    %41 = vmatprep.subr.bf16.mxu0 0
    %42 = vmatpush1.bf16.xpose.msra.mxu0 0
    %43 = vmatprep.subr.bf16.mxu0 0
    %44 = vmatpush1.bf16.xpose.msra.mxu0 0
    %45 = vmatprep.subr.bf16.mxu0 0
    %46 = vmatpush1.bf16.xpose.msra.mxu0 0
    %47 = vmatprep.subr.bf16.mxu0 0
    %48 = vmatpush1.bf16.xpose.msra.mxu0 0
    %49 = vmatprep.subr.bf16.mxu0 0
    %50 = vmatpush1.bf16.xpose.msra.mxu0 0
    %51 = vmatprep.subr.bf16.mxu0 %v34
    %52 = vmatpush1.bf16.xpose.msra.mxu0 %v33
    %53 = vmatprep.subr.bf16.mxu0 0
    %54 = vmatpush2.bf16.xpose.msra.mxu0 0
    %55 = vmatprep.subr.bf16.mxu0 0
    %56 = vmatpush2.bf16.xpose.msra.mxu0 0
    %57 = vmatprep.subr.bf16.mxu0 0
    %58 = vmatpush2.bf16.xpose.msra.mxu0 0
    %59 = vmatprep.subr.bf16.mxu0 0
    %60 = vmatpush2.bf16.xpose.msra.mxu0 0
    %61 = vmatprep.subr.bf16.mxu0 0
    %62 = vmatpush2.bf16.xpose.msra.mxu0 0
    %63 = vmatprep.subr.bf16.mxu0 0
    %64 = vmatpush2.bf16.xpose.msra.mxu0 0
    %65 = vmatprep.subr.bf16.mxu0 0
    %66 = vmatpush2.bf16.xpose.msra.mxu0 0
    %67 = vmatprep.subr.bf16.mxu0 0
    %68 = vmatpush2.bf16.xpose.msra.mxu0 0
    %69 = vmatprep.mubr.bf16.mxu0 %v34
    %70 = vmatmul.mubr.bf16.gmra.mxu0 %v33
    %v71 = vpop.f32.mrf.mxu0
    %v72 = vadd.f32 0.0, %v71
    %v73 = vpop.f32.mrf.mxu0
    %v74 = vpop.f32.mrf.mxu0
    %v75 = vpop.f32.mrf.mxu0
    %76 = vdwg.mxu0
    %v77 = vadd.f32 %v29, %v72
    %vm78 = vcmask 64512
    %79 = vst.msk [vmem:[#allocation5] sm:$0xff] %vm78, %v77
    // Predicated region
    $region14: #{tpu_custom_call.1} parent=1 // pred_check
      %p80 = pneg %p22
    $region15: #{tpu_custom_call.1} parent=1 // pred_check_branch
      %82 = sbr.rel (%p80) target = $region17
    $region16: #{tpu_custom_call.1} parent=1 // pred_region
      %v83 = vld [vmem:[#allocation5] sm:$0xff]
      %v84 = vmul.f32 %v83, 0.00048828125
      %85 = vst.msk [vmem:[#allocation5] sm:$0xff] %vm78, %v84
    $region17: #{tpu_custom_call.1} parent=1 // pred_fallthru
      _
    // Predicated region
    $region18: #{tpu_custom_call.1} parent=1 // pred_check
      _
    $region19: #{tpu_custom_call.1} parent=1 // pred_check_branch
      %87 = sbr.rel (0) target = $region21
    $region20: #{tpu_custom_call.1} parent=1 // pred_region
      %s89 = ssub.s32 128, 128
      %90 = vsyncadd [#allocation4], %s89
      %s92 = sshll.u32 [#allocation5], 4
      %s93 = int_to_ptr.vmem [resolvable:$true] %s92
      %95 = dma.vmem_to_hbm [thread:$0]  %s93, 128, %s1, [#allocation4]
    $region21: #{tpu_custom_call.1} parent=1 // pred_fallthru
      _
    // Predicated region
    $region22: #{tpu_custom_call.1} parent=1 // pred_check
      _
    $region23: #{tpu_custom_call.1} parent=1 // pred_check_branch
      %97 = sbr.rel (0) target = $region25
    $region24: #{tpu_custom_call.1} parent=1 // pred_region
      %98 = dma.done [#allocation4], 128
    $region25: #{tpu_custom_call.1} parent=1 // pred_fallthru
      _
    %99 = vsyncpa [#allocation3], 1
    %100 = vsyncpa [#allocation4], 1

</llo_original>
